<compile_context>
chip_gen: v7x
topology: tpu7x:2x2x1
jax: 0.10.0
libtpu: 0.0.40
codegen_flags: <defaults>
</compile_context>

<pallas_src>
import numpy as np
import jax
import jax.numpy as jnp
from jax.experimental import pallas as pl
from jax.experimental.pallas import tpu as pltpu

N2 = 20
LAYERS = [2 * N2, 40, 40, 2]   # 3 linear layers, tanh between the first two
OUT_PAD = 128                  # lane-dense padded output width


def mlp_kernel(x_ref, w0_ref, b0_ref, w1_ref, b1_ref, w2_ref, b2_ref, o_ref):
    # One batch tile per grid step; all three layers fused (weights are tiny
    # and VMEM-resident across the whole grid).
    x = x_ref[...]
    h0 = jnp.tanh(
        jnp.dot(x, w0_ref[...], preferred_element_type=jnp.float32) + b0_ref[...]
    )
    h1 = jnp.tanh(
        jnp.dot(h0, w1_ref[...], preferred_element_type=jnp.float32) + b1_ref[...]
    )
    # Final layer writes a lane-dense (TB, 128) tile (w2/b2 are zero-padded).
    o_ref[...] = (
        jnp.dot(h1, w2_ref[...], preferred_element_type=jnp.float32) + b2_ref[...]
    )


def _round_up(n, m):
    return ((n + m - 1) // m) * m


def dnn_forward(x, params, *, tb=1024):
    """x: (B, 40) float32; params: list of (W_(in,out), b_(1,out)).

    tb: batch tile size (rows per grid step). Large tiles (>=512) amortize the
    ~0.35us per-grid-step overhead; small batches automatically use a single
    tile rounded up to a multiple of 8 sublanes.
    """
    (w0, b0), (w1, b1), (w2, b2) = params
    B, F = x.shape
    out_dim = w2.shape[1]

    # Zero-pad the last layer to a lane-dense (multiple-of-128) output width so
    # the result store is an unmasked vst; padded columns are exactly zero and
    # get sliced off below.
    w2p = jnp.zeros((w2.shape[0], OUT_PAD), w2.dtype).at[:, :out_dim].set(w2)
    b2p = jnp.zeros((1, OUT_PAD), b2.dtype).at[:, :out_dim].set(b2)

    # Batch tile: multiple of 8 (sublane), capped by the requested tile size.
    TB = min(tb, _round_up(B, 8))
    B_pad = _round_up(B, TB)
    if B_pad != B:
        x = jnp.pad(x, ((0, B_pad - B), (0, 0)))

    grid = (B_pad // TB,)

    out = pl.pallas_call(
        mlp_kernel,
        out_shape=jax.ShapeDtypeStruct((B_pad, OUT_PAD), jnp.float32),
        grid=grid,
        in_specs=[
            # x: tiled along batch, pipelined.
            pl.BlockSpec((TB, F), lambda i: (i, 0)),
            # Weights / biases: constant index_map -> VMEM-resident, DMA'd once.
            pl.BlockSpec(w0.shape, lambda i: (0, 0)),
            pl.BlockSpec(b0.shape, lambda i: (0, 0)),
            pl.BlockSpec(w1.shape, lambda i: (0, 0)),
            pl.BlockSpec(b1.shape, lambda i: (0, 0)),
            pl.BlockSpec(w2p.shape, lambda i: (0, 0)),
            pl.BlockSpec(b2p.shape, lambda i: (0, 0)),
        ],
        out_specs=pl.BlockSpec((TB, OUT_PAD), lambda i: (i, 0)),
        compiler_params=pltpu.CompilerParams(
            # Batch tiles are independent -> shard across v7x's 2 TensorCores.
            dimension_semantics=("parallel",),
            # Usage is tiny (<~2 MiB double-buffered at TB=1024); 32 MiB is
            # safe headroom on v5e/v6e/v7x.
            vmem_limit_bytes=32 * 1024 * 1024,
        ),
    )(x, w0, b0, w1, b1, w2p, b2p)

    # Strip batch padding and the zero-padded output lanes.
    return out[:B, :out_dim]


def xavier_uniform(key, fan_in, fan_out):
    # matches torch.nn.init.xavier_uniform_ (gain=1.0)
    bound = np.sqrt(6.0 / (fan_in + fan_out))
    return jax.random.uniform(
        key, (fan_in, fan_out), minval=-bound, maxval=bound, dtype=jnp.float32
    )


def init_params(key, layers):
    params = []
    for i in range(len(layers) - 1):
        key, kw, kb = jax.random.split(key, 3)
        fan_in, fan_out = layers[i], layers[i + 1]
        w = xavier_uniform(kw, fan_in, fan_out)            # stored as (in, out)
        # PyTorch Linear default bias init: U(-1/sqrt(fan_in), 1/sqrt(fan_in))
        bb = 1.0 / np.sqrt(fan_in)
        b = jax.random.uniform(
            kb, (1, fan_out), minval=-bb, maxval=bb, dtype=jnp.float32
        )
        params.append((w, b))
    return params


def reference_forward(x, params):
    h = x
    for i, (w, b) in enumerate(params):
        h = h @ w + b
        if i < len(params) - 1:
            h = jnp.tanh(h)
    return h


if __name__ == "__main__":
    key = jax.random.PRNGKey(0)
    key, kx = jax.random.split(key)

    batch = 64
    x = jax.random.normal(kx, (batch, LAYERS[0]), dtype=jnp.float32)

    params = init_params(key, LAYERS)

    # Small tile here so the test exercises a multi-step, pipelined grid
    # (resident weights + batch padding paths); production uses tb>=512.
    out = dnn_forward(x, params, tb=32)
    out = jax.block_until_ready(out)

    ref = reference_forward(x, params)
    np.testing.assert_allclose(np.asarray(out), np.asarray(ref), rtol=1e-5, atol=1e-5)

    # Also cover the non-multiple-of-tile batch path.
    out2 = jax.block_until_ready(dnn_forward(x[:50], params, tb=32))
    np.testing.assert_allclose(
        np.asarray(out2), np.asarray(ref[:50]), rtol=1e-5, atol=1e-5
    )

    print("KERNEL_OK")
</pallas_src>

<mosaic_0001>
module attributes {stable_mosaic.version = 11 : i64} {
  func.func @mlp_kernel(%arg0: i32, %arg1: memref<32x40xf32, #tpu.memory_space<vmem>>, %arg2: memref<40x40xf32, #tpu.memory_space<vmem>>, %arg3: memref<1x40xf32, #tpu.memory_space<vmem>>, %arg4: memref<40x40xf32, #tpu.memory_space<vmem>>, %arg5: memref<1x40xf32, #tpu.memory_space<vmem>>, %arg6: memref<40x128xf32, #tpu.memory_space<vmem>>, %arg7: memref<1x128xf32, #tpu.memory_space<vmem>>, %arg8: memref<32x128xf32, #tpu.memory_space<vmem>>) attributes {dimension_semantics = [#tpu.dimension_semantics<parallel>], iteration_bounds = array<i64: 2>, scalar_prefetch = 0 : i64, scratch_operands = 0 : i64, tpu.core_type = #tpu.core_type<tc>, window_params = [{transform_indices = @transform_0, window_bounds = array<i64: 32, 40>}, {pipeline_mode = #tpu.pipeline_mode<synchronous>, transform_indices = @transform_1, window_bounds = array<i64: 40, 40>}, {pipeline_mode = #tpu.pipeline_mode<synchronous>, transform_indices = @transform_2, window_bounds = array<i64: 1, 40>}, {pipeline_mode = #tpu.pipeline_mode<synchronous>, transform_indices = @transform_3, window_bounds = array<i64: 40, 40>}, {pipeline_mode = #tpu.pipeline_mode<synchronous>, transform_indices = @transform_4, window_bounds = array<i64: 1, 40>}, {pipeline_mode = #tpu.pipeline_mode<synchronous>, transform_indices = @transform_5, window_bounds = array<i64: 40, 128>}, {pipeline_mode = #tpu.pipeline_mode<synchronous>, transform_indices = @transform_6, window_bounds = array<i64: 1, 128>}, {transform_indices = @transform_7, window_bounds = array<i64: 32, 128>}]} {
    %c0 = arith.constant 0 : index
    %c0_0 = arith.constant 0 : index
    %0 = vector.load %arg1[%c0, %c0_0] : memref<32x40xf32, #tpu.memory_space<vmem>>, vector<32x40xf32>
    %c0_1 = arith.constant 0 : index
    %c0_2 = arith.constant 0 : index
    %1 = vector.load %arg2[%c0_1, %c0_2] : memref<40x40xf32, #tpu.memory_space<vmem>>, vector<40x40xf32>
    %cst = arith.constant dense<0.000000e+00> : vector<32x40xf32>
    %2 = tpu.matmul %0, %1, %cst {dimension_numbers = #tpu.dot_dimension_numbers<[1], [0], [0], [1], [0, 0, 1, 1], [], []>} : vector<32x40xf32>, vector<40x40xf32>, vector<32x40xf32> -> vector<32x40xf32>
    %c0_3 = arith.constant 0 : index
    %c0_4 = arith.constant 0 : index
    %3 = vector.load %arg3[%c0_3, %c0_4] : memref<1x40xf32, #tpu.memory_space<vmem>>, vector<1x40xf32>
    %4 = vector.broadcast %3 : vector<1x40xf32> to vector<32x40xf32>
    %5 = arith.addf %2, %4 : vector<32x40xf32>
    %6 = math.tanh %5 : vector<32x40xf32>
    %c0_5 = arith.constant 0 : index
    %c0_6 = arith.constant 0 : index
    %7 = vector.load %arg4[%c0_5, %c0_6] : memref<40x40xf32, #tpu.memory_space<vmem>>, vector<40x40xf32>
    %cst_7 = arith.constant dense<0.000000e+00> : vector<32x40xf32>
    %8 = tpu.matmul %6, %7, %cst_7 {dimension_numbers = #tpu.dot_dimension_numbers<[1], [0], [0], [1], [0, 0, 1, 1], [], []>} : vector<32x40xf32>, vector<40x40xf32>, vector<32x40xf32> -> vector<32x40xf32>
    %c0_8 = arith.constant 0 : index
    %c0_9 = arith.constant 0 : index
    %9 = vector.load %arg5[%c0_8, %c0_9] : memref<1x40xf32, #tpu.memory_space<vmem>>, vector<1x40xf32>
    %10 = vector.broadcast %9 : vector<1x40xf32> to vector<32x40xf32>
    %11 = arith.addf %8, %10 : vector<32x40xf32>
    %12 = math.tanh %11 : vector<32x40xf32>
    %c0_10 = arith.constant 0 : index
    %c0_11 = arith.constant 0 : index
    %13 = vector.load %arg6[%c0_10, %c0_11] : memref<40x128xf32, #tpu.memory_space<vmem>>, vector<40x128xf32>
    %cst_12 = arith.constant dense<0.000000e+00> : vector<32x128xf32>
    %14 = tpu.matmul %12, %13, %cst_12 {dimension_numbers = #tpu.dot_dimension_numbers<[1], [0], [0], [1], [0, 0, 1, 1], [], []>} : vector<32x40xf32>, vector<40x128xf32>, vector<32x128xf32> -> vector<32x128xf32>
    %c0_13 = arith.constant 0 : index
    %c0_14 = arith.constant 0 : index
    %15 = vector.load %arg7[%c0_13, %c0_14] : memref<1x128xf32, #tpu.memory_space<vmem>>, vector<1x128xf32>
    %16 = vector.broadcast %15 : vector<1x128xf32> to vector<32x128xf32>
    %17 = arith.addf %14, %16 : vector<32x128xf32>
    %c0_15 = arith.constant 0 : index
    %c0_16 = arith.constant 0 : index
    %18 = vector.load %arg8[%c0_15, %c0_16] : memref<32x128xf32, #tpu.memory_space<vmem>>, vector<32x128xf32>
    tpu.vector_store %arg8[%c0_15, %c0_16], %17 {strides = array<i32>} : memref<32x128xf32, #tpu.memory_space<vmem>>, vector<32x128xf32>,
    return
  }
  func.func @transform_0(%arg0: i32) -> (i32, i32) {
    %c0_i32 = arith.constant 0 : i32
    %c0_i32_0 = arith.constant 0 : i32
    return %arg0, %c0_i32 : i32, i32
  }
  func.func @transform_1(%arg0: i32) -> (i32, i32) {
    %c0_i32 = arith.constant 0 : i32
    %c0_i32_0 = arith.constant 0 : i32
    %c0_i32_1 = arith.constant 0 : i32
    return %c0_i32, %c0_i32_0 : i32, i32
  }
  func.func @transform_2(%arg0: i32) -> (i32, i32) {
    %c0_i32 = arith.constant 0 : i32
    %c0_i32_0 = arith.constant 0 : i32
    %c0_i32_1 = arith.constant 0 : i32
    return %c0_i32, %c0_i32_0 : i32, i32
  }
  func.func @transform_3(%arg0: i32) -> (i32, i32) {
    %c0_i32 = arith.constant 0 : i32
    %c0_i32_0 = arith.constant 0 : i32
    %c0_i32_1 = arith.constant 0 : i32
    return %c0_i32, %c0_i32_0 : i32, i32
  }
  func.func @transform_4(%arg0: i32) -> (i32, i32) {
    %c0_i32 = arith.constant 0 : i32
    %c0_i32_0 = arith.constant 0 : i32
    %c0_i32_1 = arith.constant 0 : i32
    return %c0_i32, %c0_i32_0 : i32, i32
  }
  func.func @transform_5(%arg0: i32) -> (i32, i32) {
    %c0_i32 = arith.constant 0 : i32
    %c0_i32_0 = arith.constant 0 : i32
    %c0_i32_1 = arith.constant 0 : i32
    return %c0_i32, %c0_i32_0 : i32, i32
  }
  func.func @transform_6(%arg0: i32) -> (i32, i32) {
    %c0_i32 = arith.constant 0 : i32
    %c0_i32_0 = arith.constant 0 : i32
    %c0_i32_1 = arith.constant 0 : i32
    return %c0_i32, %c0_i32_0 : i32, i32
  }
  func.func @transform_7(%arg0: i32) -> (i32, i32) {
    %c0_i32 = arith.constant 0 : i32
    %c0_i32_0 = arith.constant 0 : i32
    return %arg0, %c0_i32 : i32, i32
  }
}

</mosaic_0001>

<llo_original>
// kernel: tpu_custom_call.1
$region0: #{tpu_custom_call.1}
  #allocation0 [shape = 'u32[]', space=smem, size = 0x4, offset = 0x4, fixed_abs, tag = 'smem constant byte address 0x4 - core index']
  #allocation1 [shape = 'u32[144,128]{1,0:T(1,128)}', space=vmem, size = 0x12000, scoped, tag = 'internal scratch']
  %s0 = inlined_call_operand.vmem [shape: f32[64,40], index: 0, kind: input, shape index: {}]
  %s1 = inlined_call_operand.vmem [shape: f32[40,40], index: 1, kind: input, shape index: {}]
  %s2 = inlined_call_operand.vmem [shape: f32[1,40], index: 2, kind: input, shape index: {}]
  %s3 = inlined_call_operand.vmem [shape: f32[40,40], index: 3, kind: input, shape index: {}]
  %s4 = inlined_call_operand.vmem [shape: f32[1,40], index: 4, kind: input, shape index: {}]
  %s5 = inlined_call_operand.vmem [shape: f32[40,128], index: 5, kind: input, shape index: {}]
  %s6 = inlined_call_operand.vmem [shape: f32[1,128], index: 6, kind: input, shape index: {}]
  %s7 = inlined_call_operand.hbm [shape: f32[64,128], index: 7, kind: output, shape index: {}]
  %s8 = sld [smem:[#allocation0]]
  $region61: #{tpu_custom_call.1} parent=0
    _
  %s10 = ssub.s32 1, %s8
  %s11 = scalar_select 0, %s10, %s8
  $region1: #{tpu_custom_call.1} parent=0
    #allocation2 [shape = 'u8[32768]{0}', space=vmem, size = 0x8000, scoped, tag = 'output window, operand 0']
    #allocation3 [shape = 's32[2]{0}', space=sflag, size = 0x8, scoped, tag = 'scoped memory for tpu_custom_call.1']
    %12 = vsyncpa [#allocation3], 0
    %s13 = scalar_lea.sflag [#allocation3], 1
    %14 = vsyncpa %s13, 0
    loop: start=0, step=1, limit=4
    $region2: #{tpu_custom_call.1} parent=1 // loop_pre_header
      _
    $region3: #{tpu_custom_call.1} parent=1 // loop_header
      %s16 = sphi 0, %s20
      %p17 = scmp.ge.s32.totalorder %s16, 4
      %s26 = sphi 0, %s28
      %s29 = sphi 0, %s26
      %s30 = sphi 0, %s29
      %s46 = sphi 0, %s30
      %s50 = sphi 0, %s50
      %s52 = sphi 0, %s50
      %s53 = sphi 0, %s52
      %s67 = sphi 0, %s53
      %s71 = sphi 0, %s71
      %s73 = sphi 0, %s71
      %s74 = sphi 0, %s73
      %s88 = sphi 0, %s74
      %s92 = sphi 0, %s92
      %s94 = sphi 0, %s92
      %s95 = sphi 0, %s94
      %s109 = sphi 0, %s95
      %s113 = sphi 0, %s113
      %s115 = sphi 0, %s113
      %s116 = sphi 0, %s115
      %s130 = sphi 0, %s116
      %s134 = sphi 0, %s134
      %s136 = sphi 0, %s134
      %s137 = sphi 0, %s136
      %s151 = sphi 0, %s137
      %s155 = sphi 0, %s155
      %s157 = sphi 0, %s155
      %s158 = sphi 0, %s157
      %s172 = sphi 0, %s158
      %s178 = sphi 0, %s180
      %s181 = sphi 0, %s178
      %s182 = sphi 0, %s181
      %s198 = sphi 0, %s182
    $region4: #{tpu_custom_call.1} parent=1 // loop_header_branch
      %19 = sbr.rel (%p17) target = $region8
    $region5: #{tpu_custom_call.1} parent=1 // loop_body
      %s21 = ssub.s32 %s16, 1
      %s22 = ssub.s32 %s16, 2
      %s23 = sadd.s32 %s16, 1
      %s24 = ssub.s32 %s16, %s23
      %p25 = scmp.eq.s32.totalorder %s24, 0
      %s27 = sadd.s32 %s26, 1
      %s28 = scalar_select %p25, %s26, %s27
      %p31 = pneg %p25
      %p32 = scmp.eq.s32.totalorder %s16, 1
      %p33 = por %p31, %p32
      %p34 = scmp.ne.s32.totalorder %s26, %s29
      %p35 = scmp.eq.s32.totalorder %s16, 0
      %p36 = por %p34, %p35
      %p37 = scmp.ne.s32.totalorder %s26, %s29
      %p38 = scmp.eq.s32.totalorder %s21, 1
      %p39 = por %p37, %p38
      %p40 = scmp.ne.s32.totalorder %s29, %s30
      %p41 = scmp.eq.s32.totalorder %s21, 0
      %p42 = por %p40, %p41
      %p43 = scmp.ne.s32.totalorder %s29, %s30
      %p44 = scmp.eq.s32.totalorder %s22, 1
      %p45 = por %p43, %p44
      %p47 = scmp.ne.s32.totalorder %s30, %s46
      %p48 = scmp.eq.s32.totalorder %s22, 0
      %p49 = por %p47, %p48
      %s51 = sadd.s32 %s50, 1
      %p54 = scmp.eq.s32.totalorder %s16, 1
      %p55 = scmp.ne.s32.totalorder %s50, %s52
      %p56 = scmp.eq.s32.totalorder %s16, 0
      %p57 = por %p55, %p56
      %p58 = scmp.ne.s32.totalorder %s50, %s52
      %p59 = scmp.eq.s32.totalorder %s21, 1
      %p60 = por %p58, %p59
      %p61 = scmp.ne.s32.totalorder %s52, %s53
      %p62 = scmp.eq.s32.totalorder %s21, 0
      %p63 = por %p61, %p62
      %p64 = scmp.ne.s32.totalorder %s52, %s53
      %p65 = scmp.eq.s32.totalorder %s22, 1
      %p66 = por %p64, %p65
      %p68 = scmp.ne.s32.totalorder %s53, %s67
      %p69 = scmp.eq.s32.totalorder %s22, 0
      %p70 = por %p68, %p69
      %s72 = sadd.s32 %s71, 1
      %p75 = scmp.eq.s32.totalorder %s16, 1
      %p76 = scmp.ne.s32.totalorder %s71, %s73
      %p77 = scmp.eq.s32.totalorder %s16, 0
      %p78 = por %p76, %p77
      %p79 = scmp.ne.s32.totalorder %s71, %s73
      %p80 = scmp.eq.s32.totalorder %s21, 1
      %p81 = por %p79, %p80
      %p82 = scmp.ne.s32.totalorder %s73, %s74
      %p83 = scmp.eq.s32.totalorder %s21, 0
      %p84 = por %p82, %p83
      %p85 = scmp.ne.s32.totalorder %s73, %s74
      %p86 = scmp.eq.s32.totalorder %s22, 1
      %p87 = por %p85, %p86
      %p89 = scmp.ne.s32.totalorder %s74, %s88
      %p90 = scmp.eq.s32.totalorder %s22, 0
      %p91 = por %p89, %p90
      %s93 = sadd.s32 %s92, 1
      %p96 = scmp.eq.s32.totalorder %s16, 1
      %p97 = scmp.ne.s32.totalorder %s92, %s94
      %p98 = scmp.eq.s32.totalorder %s16, 0
      %p99 = por %p97, %p98
      %p100 = scmp.ne.s32.totalorder %s92, %s94
      %p101 = scmp.eq.s32.totalorder %s21, 1
      %p102 = por %p100, %p101
      %p103 = scmp.ne.s32.totalorder %s94, %s95
      %p104 = scmp.eq.s32.totalorder %s21, 0
      %p105 = por %p103, %p104
      %p106 = scmp.ne.s32.totalorder %s94, %s95
      %p107 = scmp.eq.s32.totalorder %s22, 1
      %p108 = por %p106, %p107
      %p110 = scmp.ne.s32.totalorder %s95, %s109
      %p111 = scmp.eq.s32.totalorder %s22, 0
      %p112 = por %p110, %p111
      %s114 = sadd.s32 %s113, 1
      %p117 = scmp.eq.s32.totalorder %s16, 1
      %p118 = scmp.ne.s32.totalorder %s113, %s115
      %p119 = scmp.eq.s32.totalorder %s16, 0
      %p120 = por %p118, %p119
      %p121 = scmp.ne.s32.totalorder %s113, %s115
      %p122 = scmp.eq.s32.totalorder %s21, 1
      %p123 = por %p121, %p122
      %p124 = scmp.ne.s32.totalorder %s115, %s116
      %p125 = scmp.eq.s32.totalorder %s21, 0
      %p126 = por %p124, %p125
      %p127 = scmp.ne.s32.totalorder %s115, %s116
      %p128 = scmp.eq.s32.totalorder %s22, 1
      %p129 = por %p127, %p128
      %p131 = scmp.ne.s32.totalorder %s116, %s130
      %p132 = scmp.eq.s32.totalorder %s22, 0
      %p133 = por %p131, %p132
      %s135 = sadd.s32 %s134, 1
      %p138 = scmp.eq.s32.totalorder %s16, 1
      %p139 = scmp.ne.s32.totalorder %s134, %s136
      %p140 = scmp.eq.s32.totalorder %s16, 0
      %p141 = por %p139, %p140
      %p142 = scmp.ne.s32.totalorder %s134, %s136
      %p143 = scmp.eq.s32.totalorder %s21, 1
      %p144 = por %p142, %p143
      %p145 = scmp.ne.s32.totalorder %s136, %s137
      %p146 = scmp.eq.s32.totalorder %s21, 0
      %p147 = por %p145, %p146
      %p148 = scmp.ne.s32.totalorder %s136, %s137
      %p149 = scmp.eq.s32.totalorder %s22, 1
      %p150 = por %p148, %p149
      %p152 = scmp.ne.s32.totalorder %s137, %s151
      %p153 = scmp.eq.s32.totalorder %s22, 0
      %p154 = por %p152, %p153
      %s156 = sadd.s32 %s155, 1
      %p159 = scmp.eq.s32.totalorder %s16, 1
      %p160 = scmp.ne.s32.totalorder %s155, %s157
      %p161 = scmp.eq.s32.totalorder %s16, 0
      %p162 = por %p160, %p161
      %p163 = scmp.ne.s32.totalorder %s155, %s157
      %p164 = scmp.eq.s32.totalorder %s21, 1
      %p165 = por %p163, %p164
      %p166 = scmp.ne.s32.totalorder %s157, %s158
      %p167 = scmp.eq.s32.totalorder %s21, 0
      %p168 = por %p166, %p167
      %p169 = scmp.ne.s32.totalorder %s157, %s158
      %p170 = scmp.eq.s32.totalorder %s22, 1
      %p171 = por %p169, %p170
      %p173 = scmp.ne.s32.totalorder %s158, %s172
      %p174 = scmp.eq.s32.totalorder %s22, 0
      %p175 = por %p173, %p174
      %s176 = ssub.s32 %s16, %s23
      %p177 = scmp.eq.s32.totalorder %s176, 0
      %s179 = sadd.s32 %s178, 1
      %s180 = scalar_select %p177, %s178, %s179
      %p183 = pneg %p177
      %p184 = scmp.eq.s32.totalorder %s16, 1
      %p185 = por %p183, %p184
      %p186 = scmp.ne.s32.totalorder %s178, %s181
      %p187 = scmp.eq.s32.totalorder %s16, 0
      %p188 = por %p186, %p187
      %p189 = scmp.ne.s32.totalorder %s178, %s181
      %p190 = scmp.eq.s32.totalorder %s21, 1
      %p191 = por %p189, %p190
      %p192 = scmp.ne.s32.totalorder %s181, %s182
      %p193 = scmp.eq.s32.totalorder %s21, 0
      %p194 = por %p192, %p193
      %p195 = scmp.ne.s32.totalorder %s181, %s182
      %p196 = scmp.eq.s32.totalorder %s22, 1
      %p197 = por %p195, %p196
      %p199 = scmp.ne.s32.totalorder %s182, %s198
      %p200 = scmp.eq.s32.totalorder %s22, 0
      %p201 = por %p199, %p200
      %p202 = scmp.le.s32.totalorder 1, %s16
      %p203 = scmp.lt.s32.totalorder %s16, 3
      %p204 = pnand %p202, %p203
      %p205 = pneg %p204
      // Predicated region
      $region9: #{tpu_custom_call.1} parent=5 // pred_check
        _
      $region10: #{tpu_custom_call.1} parent=5 // pred_check_branch
        %207 = sbr.rel (%p204) target = $region12
      $region11: #{tpu_custom_call.1} parent=5 // pred_region
        %s208 = ssub.s32 %s16, 1
        // Predicated region
        $region13: #{tpu_custom_call.1} parent=11 // pred_check
          %p209 = pneg %p63
        $region14: #{tpu_custom_call.1} parent=11 // pred_check_branch
          %211 = sbr.rel (%p209) target = $region16
        $region15: #{tpu_custom_call.1} parent=11 // pred_region
          _
        $region16: #{tpu_custom_call.1} parent=11 // pred_fallthru
          _
        // Predicated region
        $region17: #{tpu_custom_call.1} parent=11 // pred_check
          %p212 = pneg %p84
        $region18: #{tpu_custom_call.1} parent=11 // pred_check_branch
          %214 = sbr.rel (%p212) target = $region20
        $region19: #{tpu_custom_call.1} parent=11 // pred_region
          _
        $region20: #{tpu_custom_call.1} parent=11 // pred_fallthru
          _
        // Predicated region
        $region21: #{tpu_custom_call.1} parent=11 // pred_check
          %p215 = pneg %p105
        $region22: #{tpu_custom_call.1} parent=11 // pred_check_branch
          %217 = sbr.rel (%p215) target = $region24
        $region23: #{tpu_custom_call.1} parent=11 // pred_region
          _
        $region24: #{tpu_custom_call.1} parent=11 // pred_fallthru
          _
        // Predicated region
        $region25: #{tpu_custom_call.1} parent=11 // pred_check
          %p218 = pneg %p126
        $region26: #{tpu_custom_call.1} parent=11 // pred_check_branch
          %220 = sbr.rel (%p218) target = $region28
        $region27: #{tpu_custom_call.1} parent=11 // pred_region
          _
        $region28: #{tpu_custom_call.1} parent=11 // pred_fallthru
          _
        // Predicated region
        $region29: #{tpu_custom_call.1} parent=11 // pred_check
          %p221 = pneg %p147
        $region30: #{tpu_custom_call.1} parent=11 // pred_check_branch
          %223 = sbr.rel (%p221) target = $region32
        $region31: #{tpu_custom_call.1} parent=11 // pred_region
          _
        $region32: #{tpu_custom_call.1} parent=11 // pred_fallthru
          _
        // Predicated region
        $region33: #{tpu_custom_call.1} parent=11 // pred_check
          %p224 = pneg %p168
        $region34: #{tpu_custom_call.1} parent=11 // pred_check_branch
          %226 = sbr.rel (%p224) target = $region36
        $region35: #{tpu_custom_call.1} parent=11 // pred_region
          _
        $region36: #{tpu_custom_call.1} parent=11 // pred_fallthru
          _
      $region12: #{tpu_custom_call.1} parent=5 // pred_fallthru
        _
      %p227 = scmp.lt.s32.totalorder %s16, 2
      // Predicated region
      $region37: #{tpu_custom_call.1} parent=5 // pred_check
        %p228 = pneg %p227
      $region38: #{tpu_custom_call.1} parent=5 // pred_check_branch
        %230 = sbr.rel (%p228) target = $region40
      $region39: #{tpu_custom_call.1} parent=5 // pred_region
        // Predicated region
        $region41: #{tpu_custom_call.1} parent=39 // pred_check
          %p231 = pneg %p36
        $region42: #{tpu_custom_call.1} parent=39 // pred_check_branch
          %233 = sbr.rel (%p231) target = $region44
        $region43: #{tpu_custom_call.1} parent=39 // pred_region
          %s234 = smul.u32 4, %s16
          %p235 = scmp.lt.s32.totalorder %s234, 7
          %s236 = scalar_select %p235, %s234, 7
          %s237 = smul.addr %s236, 8
          %s238 = scalar_lea.vmem %s0, %s237
          %s239 = smul.u32 4, %s16
        $region44: #{tpu_custom_call.1} parent=39 // pred_fallthru
          _
      $region40: #{tpu_custom_call.1} parent=5 // pred_fallthru
        _
      %p240 = scmp.le.s32.totalorder 1, %s16
      %p241 = scmp.lt.s32.totalorder %s16, 3
      %p242 = pnand %p240, %p241
      %p243 = pneg %p242
      // Predicated region
      $region45: #{tpu_custom_call.1} parent=5 // pred_check
        _
      $region46: #{tpu_custom_call.1} parent=5 // pred_check_branch
        %245 = sbr.rel (%p242) target = $region48
      $region47: #{tpu_custom_call.1} parent=5 // pred_region
        %s246 = ssub.s32 %s16, 1
        %s247 = smul.u32 4, %s21
        %p248 = scmp.lt.s32.totalorder %s247, 7
        %s249 = scalar_select %p248, %s247, 7
        %s250 = smul.addr %s249, 8
        %s251 = scalar_lea.vmem %s0, %s250
        %p252 = pneg %p42
        %p253 = pneg %p39
        %p254 = pneg %p63
        %p255 = pneg %p60
        %p256 = pneg %p84
        %p257 = pneg %p81
        %p258 = pneg %p105
        %p259 = pneg %p102
        %p260 = pneg %p126
        %p261 = pneg %p123
        %p262 = pneg %p147
        %p263 = pneg %p144
        %p264 = pneg %p168
        %p265 = pneg %p165
        %p266 = pneg %p194
        %p267 = pneg %p191
        %s268 = sand.u32 %s181, 1
        %s269 = scalar_lea.sflag [#allocation3], %s268
        %s270 = sand.u32 %s181, 1
        %s271 = smul.addr %s270, 32
        %s272 = scalar_lea.vmem [#allocation2], %s271
        %s273 = smul.u32 4, %s21
        %p274 = scmp.lt.s32.totalorder %s273, 7
        %s275 = scalar_select %p274, %s273, 7
        %s276 = smul.addr %s275, 8
        %s277 = scalar_lea.vmem %s0, %s276
        %s278 = smul.u32 4, %s21
        %s279 = smul.u32 4, %s21
        %v280 = vld [vmem:[%s277] sm:$0xff]
        %v281 = vld [vmem:[%s277 + $0x8] sm:$0xff]
        %v282 = vld [vmem:[%s277 + $0x10] sm:$0xff]
        %v283 = vld [vmem:[%s277 + $0x18] sm:$0xff]
        %v284 = vld [vmem:[%s1] sm:$0xff]
        %v285 = vld [vmem:[%s1 + $0x8] sm:$0xff]
        %v286 = vld [vmem:[%s1 + $0x10] sm:$0xff]
        %v287 = vld [vmem:[%s1 + $0x18] sm:$0xff]
        %v288 = vld [vmem:[%s1 + $0x20] sm:$0xff]
        %v289 = vld [vmem:[%s2] sm:$0x1]
        %v291 = vlaneseq
        %v292 = vshrl.u32 %v291, 7
        %v293 = vsub.s32 0, %v292
        %v294 = vrot.slane %v289, %v293
        %vm296 = vcmask 326656
        %v298 = vsel %vm296, %v280, 0
        %v301 = vsel %vm296, %v281, 0
        %v304 = vsel %vm296, %v282, 0
        %v307 = vsel %vm296, %v283, 0
        %309 = vmatprep.subr.mxu0 0.0
        %310 = vmatpush1.msra.mxu0 %v284
        %311 = vmatprep.subr.mxu0 0.0
        %312 = vmatpush1.msra.mxu0 %v285
        %313 = vmatprep.subr.mxu0 0.0
        %314 = vmatpush1.msra.mxu0 %v286
        %315 = vmatprep.subr.mxu0 0.0
        %316 = vmatpush1.msra.mxu0 %v287
        %317 = vmatprep.subr.mxu0 0.0
        %318 = vmatpush1.msra.mxu0 %v288
        %319 = vmatprep.subr.mxu0 0.0
        %320 = vmatpush1.msra.mxu0 0.0
        %321 = vmatprep.subr.mxu0 0.0
        %322 = vmatpush1.msra.mxu0 0.0
        %323 = vmatprep.subr.mxu0 0.0
        %324 = vmatpush1.msra.mxu0 0.0
        %325 = vmatprep.subr.mxu0 0.0
        %326 = vmatpush1.msra.mxu0 0.0
        %327 = vmatprep.subr.mxu0 0.0
        %328 = vmatpush1.msra.mxu0 0.0
        %329 = vmatprep.subr.mxu0 0.0
        %330 = vmatpush1.msra.mxu0 0.0
        %331 = vmatprep.subr.mxu0 0.0
        %332 = vmatpush1.msra.mxu0 0.0
        %333 = vmatprep.subr.mxu0 0.0
        %334 = vmatpush1.msra.mxu0 0.0
        %335 = vmatprep.subr.mxu0 0.0
        %336 = vmatpush1.msra.mxu0 0.0
        %337 = vmatprep.subr.mxu0 0.0
        %338 = vmatpush1.msra.mxu0 0.0
        %339 = vmatprep.subr.mxu0 0.0
        %340 = vmatpush1.msra.mxu0 0.0
        %341 = vmatprep.subr.mxu0 0.0
        %342 = vmatpush1.msra.mxu0 0.0
        %343 = vmatprep.subr.mxu0 0.0
        %344 = vmatpush1.msra.mxu0 0.0
        %345 = vmatprep.subr.mxu0 0.0
        %346 = vmatpush1.msra.mxu0 0.0
        %347 = vmatprep.subr.mxu0 0.0
        %348 = vmatpush1.msra.mxu0 0.0
        %349 = vmatprep.subr.mxu0 0.0
        %350 = vmatpush1.msra.mxu0 0.0
        %351 = vmatprep.subr.mxu0 0.0
        %352 = vmatpush1.msra.mxu0 0.0
        %353 = vmatprep.subr.mxu0 0.0
        %354 = vmatpush1.msra.mxu0 0.0
        %355 = vmatprep.subr.mxu0 0.0
        %356 = vmatpush1.msra.mxu0 0.0
        %357 = vmatprep.subr.mxu0 0.0
        %358 = vmatpush1.msra.mxu0 0.0
        %359 = vmatprep.subr.mxu0 0.0
        %360 = vmatpush1.msra.mxu0 0.0
        %361 = vmatprep.subr.mxu0 0.0
        %362 = vmatpush1.msra.mxu0 0.0
        %363 = vmatprep.subr.mxu0 0.0
        %364 = vmatpush1.msra.mxu0 0.0
        %365 = vmatprep.subr.mxu0 0.0
        %366 = vmatpush1.msra.mxu0 0.0
        %367 = vmatprep.subr.mxu0 0.0
        %368 = vmatpush1.msra.mxu0 0.0
        %369 = vmatprep.subr.mxu0 0.0
        %370 = vmatpush1.msra.mxu0 0.0
        %371 = vmatprep.subr.mxu0 0.0
        %372 = vmatpush1.msra.mxu0 0.0
        %373 = vmatprep.mubr.f32.mxu0 0.0
        %374 = vmatmul.mubr.f32.gmra.mrb[0].mxu0 %v298
        %v375 = vpop.f32.mrb[0].mxu0
        %v376 = vadd.f32 %v294, %v375
        %v377 = vpop.f32.mrb[0].mxu0
        %378 = vmatprep.mubr.f32.mxu0 0.0
        %379 = vmatmul.mubr.f32.gmra.mrb[0].mxu0 %v301
        %v380 = vpop.f32.mrb[0].mxu0
        %v381 = vadd.f32 %v294, %v380
        %v382 = vpop.f32.mrb[0].mxu0
        %383 = vmatprep.mubr.f32.mxu0 0.0
        %384 = vmatmul.mubr.f32.gmra.mrb[0].mxu0 %v304
        %v385 = vpop.f32.mrb[0].mxu0
        %v386 = vadd.f32 %v294, %v385
        %v387 = vpop.f32.mrb[0].mxu0
        %388 = vmatprep.mubr.f32.mxu0 0.0
        %389 = vmatmul.mubr.f32.gmra.mrb[0].mxu0 %v307
        %v390 = vpop.f32.mrb[0].mxu0
        %v391 = vadd.f32 %v294, %v390
        %v392 = vpop.f32.mrb[0].mxu0
        %393 = vdwg.mxu0
        %v394 = vtanh.pop %v376
        %v395 = vtanh.pop %v381
        %v396 = vtanh.pop %v386
        %v397 = vtanh.pop %v391
        %v398 = vld [vmem:[%s3] sm:$0xff]
        %v399 = vld [vmem:[%s3 + $0x8] sm:$0xff]
        %v400 = vld [vmem:[%s3 + $0x10] sm:$0xff]
        %v401 = vld [vmem:[%s3 + $0x18] sm:$0xff]
        %v402 = vld [vmem:[%s3 + $0x20] sm:$0xff]
        %v403 = vld [vmem:[%s4] sm:$0x1]
        %v405 = vlaneseq
        %v406 = vshrl.u32 %v405, 7
        %v407 = vsub.s32 0, %v406
        %v408 = vrot.slane %v403, %v407
        %v411 = vsel %vm296, %v394, 0
        %v414 = vsel %vm296, %v395, 0
        %v417 = vsel %vm296, %v396, 0
        %v420 = vsel %vm296, %v397, 0
        %422 = vmatprep.subr.mxu0 0.0
        %423 = vmatpush1.msra.mxu0 %v398
        %424 = vmatprep.subr.mxu0 0.0
        %425 = vmatpush1.msra.mxu0 %v399
        %426 = vmatprep.subr.mxu0 0.0
        %427 = vmatpush1.msra.mxu0 %v400
        %428 = vmatprep.subr.mxu0 0.0
        %429 = vmatpush1.msra.mxu0 %v401
        %430 = vmatprep.subr.mxu0 0.0
        %431 = vmatpush1.msra.mxu0 %v402
        %432 = vmatprep.subr.mxu0 0.0
        %433 = vmatpush1.msra.mxu0 0.0
        %434 = vmatprep.subr.mxu0 0.0
        %435 = vmatpush1.msra.mxu0 0.0
        %436 = vmatprep.subr.mxu0 0.0
        %437 = vmatpush1.msra.mxu0 0.0
        %438 = vmatprep.subr.mxu0 0.0
        %439 = vmatpush1.msra.mxu0 0.0
        %440 = vmatprep.subr.mxu0 0.0
        %441 = vmatpush1.msra.mxu0 0.0
        %442 = vmatprep.subr.mxu0 0.0
        %443 = vmatpush1.msra.mxu0 0.0
        %444 = vmatprep.subr.mxu0 0.0
        %445 = vmatpush1.msra.mxu0 0.0
        %446 = vmatprep.subr.mxu0 0.0
        %447 = vmatpush1.msra.mxu0 0.0
        %448 = vmatprep.subr.mxu0 0.0
        %449 = vmatpush1.msra.mxu0 0.0
        %450 = vmatprep.subr.mxu0 0.0
        %451 = vmatpush1.msra.mxu0 0.0
        %452 = vmatprep.subr.mxu0 0.0
        %453 = vmatpush1.msra.mxu0 0.0
        %454 = vmatprep.subr.mxu0 0.0
        %455 = vmatpush1.msra.mxu0 0.0
        %456 = vmatprep.subr.mxu0 0.0
        %457 = vmatpush1.msra.mxu0 0.0
        %458 = vmatprep.subr.mxu0 0.0
        %459 = vmatpush1.msra.mxu0 0.0
        %460 = vmatprep.subr.mxu0 0.0
        %461 = vmatpush1.msra.mxu0 0.0
        %462 = vmatprep.subr.mxu0 0.0
        %463 = vmatpush1.msra.mxu0 0.0
        %464 = vmatprep.subr.mxu0 0.0
        %465 = vmatpush1.msra.mxu0 0.0
        %466 = vmatprep.subr.mxu0 0.0
        %467 = vmatpush1.msra.mxu0 0.0
        %468 = vmatprep.subr.mxu0 0.0
        %469 = vmatpush1.msra.mxu0 0.0
        %470 = vmatprep.subr.mxu0 0.0
        %471 = vmatpush1.msra.mxu0 0.0
        %472 = vmatprep.subr.mxu0 0.0
        %473 = vmatpush1.msra.mxu0 0.0
        %474 = vmatprep.subr.mxu0 0.0
        %475 = vmatpush1.msra.mxu0 0.0
        %476 = vmatprep.subr.mxu0 0.0
        %477 = vmatpush1.msra.mxu0 0.0
        %478 = vmatprep.subr.mxu0 0.0
        %479 = vmatpush1.msra.mxu0 0.0
        %480 = vmatprep.subr.mxu0 0.0
        %481 = vmatpush1.msra.mxu0 0.0
        %482 = vmatprep.subr.mxu0 0.0
        %483 = vmatpush1.msra.mxu0 0.0
        %484 = vmatprep.subr.mxu0 0.0
        %485 = vmatpush1.msra.mxu0 0.0
        %486 = vmatprep.mubr.f32.mxu0 0.0
        %487 = vmatmul.mubr.f32.gmra.mrb[0].mxu0 %v411
        %v488 = vpop.f32.mrb[0].mxu0
        %v489 = vadd.f32 %v408, %v488
        %v490 = vpop.f32.mrb[0].mxu0
        %491 = vmatprep.mubr.f32.mxu0 0.0
        %492 = vmatmul.mubr.f32.gmra.mrb[0].mxu0 %v414
        %v493 = vpop.f32.mrb[0].mxu0
        %v494 = vadd.f32 %v408, %v493
        %v495 = vpop.f32.mrb[0].mxu0
        %496 = vmatprep.mubr.f32.mxu0 0.0
        %497 = vmatmul.mubr.f32.gmra.mrb[0].mxu0 %v417
        %v498 = vpop.f32.mrb[0].mxu0
        %v499 = vadd.f32 %v408, %v498
        %v500 = vpop.f32.mrb[0].mxu0
        %501 = vmatprep.mubr.f32.mxu0 0.0
        %502 = vmatmul.mubr.f32.gmra.mrb[0].mxu0 %v420
        %v503 = vpop.f32.mrb[0].mxu0
        %v504 = vadd.f32 %v408, %v503
        %v505 = vpop.f32.mrb[0].mxu0
        %506 = vdwg.mxu0
        %v507 = vtanh.pop %v489
        %v508 = vtanh.pop %v494
        %v509 = vtanh.pop %v499
        %v510 = vtanh.pop %v504
        %v511 = vld [vmem:[%s5] sm:$0xff]
        %v512 = vld [vmem:[%s5 + $0x8] sm:$0xff]
        %v513 = vld [vmem:[%s5 + $0x10] sm:$0xff]
        %v514 = vld [vmem:[%s5 + $0x18] sm:$0xff]
        %v515 = vld [vmem:[%s5 + $0x20] sm:$0xff]
        %v516 = vld [vmem:[%s6] sm:$0x1]
        %v518 = vlaneseq
        %v519 = vshrl.u32 %v518, 7
        %v520 = vsub.s32 0, %v519
        %v521 = vrot.slane %v516, %v520
        %v524 = vsel %vm296, %v507, 0
        %v527 = vsel %vm296, %v508, 0
        %v530 = vsel %vm296, %v509, 0
        %v533 = vsel %vm296, %v510, 0
        %535 = vmatprep.subr.mxu0 0.0
        %536 = vmatpush1.msra.mxu0 %v511
        %537 = vmatprep.subr.mxu0 0.0
        %538 = vmatpush1.msra.mxu0 %v512
        %539 = vmatprep.subr.mxu0 0.0
        %540 = vmatpush1.msra.mxu0 %v513
        %541 = vmatprep.subr.mxu0 0.0
        %542 = vmatpush1.msra.mxu0 %v514
        %543 = vmatprep.subr.mxu0 0.0
        %544 = vmatpush1.msra.mxu0 %v515
        %545 = vmatprep.subr.mxu0 0.0
        %546 = vmatpush1.msra.mxu0 0.0
        %547 = vmatprep.subr.mxu0 0.0
        %548 = vmatpush1.msra.mxu0 0.0
        %549 = vmatprep.subr.mxu0 0.0
        %550 = vmatpush1.msra.mxu0 0.0
        %551 = vmatprep.subr.mxu0 0.0
        %552 = vmatpush1.msra.mxu0 0.0
        %553 = vmatprep.subr.mxu0 0.0
        %554 = vmatpush1.msra.mxu0 0.0
        %555 = vmatprep.subr.mxu0 0.0
        %556 = vmatpush1.msra.mxu0 0.0
        %557 = vmatprep.subr.mxu0 0.0
        %558 = vmatpush1.msra.mxu0 0.0
        %559 = vmatprep.subr.mxu0 0.0
        %560 = vmatpush1.msra.mxu0 0.0
        %561 = vmatprep.subr.mxu0 0.0
        %562 = vmatpush1.msra.mxu0 0.0
        %563 = vmatprep.subr.mxu0 0.0
        %564 = vmatpush1.msra.mxu0 0.0
        %565 = vmatprep.subr.mxu0 0.0
        %566 = vmatpush1.msra.mxu0 0.0
        %567 = vmatprep.subr.mxu0 0.0
        %568 = vmatpush1.msra.mxu0 0.0
        %569 = vmatprep.subr.mxu0 0.0
        %570 = vmatpush1.msra.mxu0 0.0
        %571 = vmatprep.subr.mxu0 0.0
        %572 = vmatpush1.msra.mxu0 0.0
        %573 = vmatprep.subr.mxu0 0.0
        %574 = vmatpush1.msra.mxu0 0.0
        %575 = vmatprep.subr.mxu0 0.0
        %576 = vmatpush1.msra.mxu0 0.0
        %577 = vmatprep.subr.mxu0 0.0
        %578 = vmatpush1.msra.mxu0 0.0
        %579 = vmatprep.subr.mxu0 0.0
        %580 = vmatpush1.msra.mxu0 0.0
        %581 = vmatprep.subr.mxu0 0.0
        %582 = vmatpush1.msra.mxu0 0.0
        %583 = vmatprep.subr.mxu0 0.0
        %584 = vmatpush1.msra.mxu0 0.0
        %585 = vmatprep.subr.mxu0 0.0
        %586 = vmatpush1.msra.mxu0 0.0
        %587 = vmatprep.subr.mxu0 0.0
        %588 = vmatpush1.msra.mxu0 0.0
        %589 = vmatprep.subr.mxu0 0.0
        %590 = vmatpush1.msra.mxu0 0.0
        %591 = vmatprep.subr.mxu0 0.0
        %592 = vmatpush1.msra.mxu0 0.0
        %593 = vmatprep.subr.mxu0 0.0
        %594 = vmatpush1.msra.mxu0 0.0
        %595 = vmatprep.subr.mxu0 0.0
        %596 = vmatpush1.msra.mxu0 0.0
        %597 = vmatprep.subr.mxu0 0.0
        %598 = vmatpush1.msra.mxu0 0.0
        %599 = vmatprep.mubr.f32.mxu0 0.0
        %600 = vmatmul.mubr.f32.gmra.mrb[0].mxu0 %v524
        %v601 = vpop.f32.mrb[0].mxu0
        %v602 = vadd.f32 %v521, %v601
        %v603 = vpop.f32.mrb[0].mxu0
        %604 = vmatprep.mubr.f32.mxu0 0.0
        %605 = vmatmul.mubr.f32.gmra.mrb[0].mxu0 %v527
        %v606 = vpop.f32.mrb[0].mxu0
        %v607 = vadd.f32 %v521, %v606
        %v608 = vpop.f32.mrb[0].mxu0
        %609 = vmatprep.mubr.f32.mxu0 0.0
        %610 = vmatmul.mubr.f32.gmra.mrb[0].mxu0 %v530
        %v611 = vpop.f32.mrb[0].mxu0
        %v612 = vadd.f32 %v521, %v611
        %v613 = vpop.f32.mrb[0].mxu0
        %614 = vmatprep.mubr.f32.mxu0 0.0
        %615 = vmatmul.mubr.f32.gmra.mrb[0].mxu0 %v533
        %v616 = vpop.f32.mrb[0].mxu0
        %v617 = vadd.f32 %v521, %v616
        %v618 = vpop.f32.mrb[0].mxu0
        %619 = vdwg.mxu0
        %620 = vst [vmem:[%s272] sm:$0xff] %v602
        %621 = vst [vmem:[%s272 + $0x8] sm:$0xff] %v607
        %622 = vst [vmem:[%s272 + $0x10] sm:$0xff] %v612
        %623 = vst [vmem:[%s272 + $0x18] sm:$0xff] %v617
        %s624 = sand.u32 %s181, 1
        %s625 = scalar_lea.sflag [#allocation3], %s624
        %s626 = sand.u32 %s181, 1
        %s627 = smul.addr %s626, 32
        %s628 = scalar_lea.vmem [#allocation2], %s627
        // Predicated region
        $region49: #{tpu_custom_call.1} parent=47 // pred_check
          %p629 = pneg %p191
        $region50: #{tpu_custom_call.1} parent=47 // pred_check_branch
          %631 = sbr.rel (%p629) target = $region52
        $region51: #{tpu_custom_call.1} parent=47 // pred_region
          %s632 = smul.u32 4, %s21
          %s634 = ssub.s32 512, 512
          %635 = vsyncadd %s625, %s634
          %s636 = smul.addr %s632, 128
          %s637 = scalar_lea.hbm %s7, %s636
          %s638 = sshll.u32 %s628, 4
          %s639 = int_to_ptr.vmem [resolvable:$true] %s638
          %644 = dma.vmem_to_hbm [thread:$0]  %s639, 512, %s637, %s625, 128, 128, 8
        $region52: #{tpu_custom_call.1} parent=47 // pred_fallthru
          _
      $region48: #{tpu_custom_call.1} parent=5 // pred_fallthru
        _
      %p645 = scmp.le.s32.totalorder 2, %s16
      // Predicated region
      $region53: #{tpu_custom_call.1} parent=5 // pred_check
        %p646 = pneg %p645
      $region54: #{tpu_custom_call.1} parent=5 // pred_check_branch
        %648 = sbr.rel (%p646) target = $region56
      $region55: #{tpu_custom_call.1} parent=5 // pred_region
        %s649 = ssub.s32 %s16, 2
        // Predicated region
        $region57: #{tpu_custom_call.1} parent=55 // pred_check
          %p650 = pneg %p197
        $region58: #{tpu_custom_call.1} parent=55 // pred_check_branch
          %652 = sbr.rel (%p650) target = $region60
        $region59: #{tpu_custom_call.1} parent=55 // pred_region
          %s653 = sand.u32 %s182, 1
          %s654 = scalar_lea.sflag [#allocation3], %s653
          %s655 = sand.u32 %s182, 1
          %s656 = smul.addr %s655, 32
          %s657 = scalar_lea.vmem [#allocation2], %s656
          %658 = dma.done %s654, 512
        $region60: #{tpu_custom_call.1} parent=55 // pred_fallthru
          _
      $region56: #{tpu_custom_call.1} parent=5 // pred_fallthru
        _
    $region6: #{tpu_custom_call.1} parent=1 // loop_footer
      %s20 = sadd.s32 1, %s16
    $region7: #{tpu_custom_call.1} parent=1 // loop_footer_branch
      %15 = sbr.rel target = $region3
    $region8: #{tpu_custom_call.1} parent=1 // loop_exit
      _
    %659 = vsyncpa [#allocation3], 1
    %s660 = scalar_lea.sflag [#allocation3], 1
    %661 = vsyncpa %s660, 1

</llo_original>
